<compile_context>
chip_gen: v6e
topology: v6e:2x2x1
jax: 0.10.0
libtpu: 0.0.40
codegen_flags: <defaults>
</compile_context>

<pallas_src>
import functools

import jax
import jax.numpy as jnp
import numpy as np
from jax.experimental import pallas as pl
from jax.experimental.pallas import tpu as pltpu


def _infonce_kernel(x_ref, y_ref, w1_ref, b1_ref, w2_ref, b2_ref, out_ref,
                    *, n_rows, y_dim, hidden, tile_n, ragged, fuse_l2):
    x = x_ref[...]                        # [tile_n, x_dim]
    y = y_ref[...]                        # [tile_n, y_dim]

    if ragged:
        # Only compiled in when tile_n does not divide n_rows.  Masking x/y up
        # front keeps mu/logvar finite regardless of what lies past the array
        # edge; masking inv_var zeroes every row-sum that carries an iv factor.
        rows = pl.program_id(0) * tile_n + jax.lax.broadcasted_iota(
            jnp.int32, (tile_n, 1), 0)
        valid = rows < n_rows
        x = jnp.where(valid, x, 0.0)
        y = jnp.where(valid, y, 0.0)

    # Fused layer 1 for both heads: [tile_n, 2H]
    h = jnp.maximum(
        jnp.dot(x, w1_ref[...], preferred_element_type=jnp.float32) + b1_ref[...],
        0.0)

    if fuse_l2:
        # Block-diagonal layer 2 (exact; zero blocks are free when 2H <= MXU K).
        z = jnp.dot(h, w2_ref[...], preferred_element_type=jnp.float32) + b2_ref[...]
        mu = z[:, :y_dim]                 # [tile_n, y_dim]
        lv_pre = z[:, y_dim:]
    else:
        w2 = w2_ref[...]                  # [2, H, y_dim]
        b2 = b2_ref[...]                  # [1, 2*y_dim]
        mu = jnp.dot(h[:, :hidden], w2[0],
                     preferred_element_type=jnp.float32) + b2[:, :y_dim]
        lv_pre = jnp.dot(h[:, hidden:], w2[1],
                         preferred_element_type=jnp.float32) + b2[:, y_dim:]

    logvar = jnp.tanh(lv_pre)
    inv_var = jnp.exp(-logvar)            # bounded in [e^-1, e^1]
    if ragged:
        inv_var = jnp.where(valid, inv_var, 0.0)

    mu_iv = mu * inv_var                  # shared between pos / C / colsum
    diff = mu - y
    pos = -0.5 * diff * diff * inv_var
    c_term = mu * mu_iv

    # Per-tile partials: 6 rows of [y_dim].  Only sublane reductions here;
    # the cross-lane reductions happen in the plain-JAX finalize.
    out_ref[0:1, :] = jnp.sum(pos, axis=0, keepdims=True)       # sum pos
    out_ref[1:2, :] = jnp.sum(c_term, axis=0, keepdims=True)    # sum mu^2*iv
    out_ref[2:3, :] = jnp.sum(mu_iv, axis=0, keepdims=True)     # colsum(mu*iv)
    out_ref[3:4, :] = jnp.sum(inv_var, axis=0, keepdims=True)   # colsum(iv)
    out_ref[4:5, :] = jnp.sum(y, axis=0, keepdims=True)         # colsum(y)
    out_ref[5:6, :] = jnp.sum(y * y, axis=0, keepdims=True)     # colsum(y^2)


def _fuse_params(params, fuse_l2):
    """Concatenate the two MLPs into one layer-1 and one layer-2."""
    (w1m, b1m, w2m, b2m, w1v, b1v, w2v, b2v) = params
    hidden = w1m.shape[1]
    y_dim = w2m.shape[1]
    w1 = jnp.concatenate([w1m, w1v], axis=1)                     # [x_dim, 2H]
    b1 = jnp.concatenate([b1m, b1v], axis=1)                     # [1, 2H]
    b2 = jnp.concatenate([b2m, b2v], axis=1)                     # [1, 2*y_dim]
    if fuse_l2:
        zeros = jnp.zeros((hidden, y_dim), jnp.float32)
        w2 = jnp.concatenate([
            jnp.concatenate([w2m, zeros], axis=1),
            jnp.concatenate([zeros, w2v], axis=1)], axis=0)      # [2H, 2*y_dim]
    else:
        w2 = jnp.stack([w2m, w2v], axis=0)                       # [2, H, y_dim]
    return w1, b1, w2, b2


def _pad128(d):
    return ((d + 127) // 128) * 128


def _vmem_cap_bytes():
    """Generation-aware VMEM cap: ~48 MiB on v7x (64 MiB phys), ~96 MiB on v5e/v6e."""
    try:
        phys = int(pltpu.get_tpu_info().vmem_capacity_bytes)
    except Exception:  # fall back to the smallest generation (v7x)
        phys = 64 << 20
    return max(phys * 3 // 4, 16 << 20)


def _vmem_estimate_bytes(tile_n, x_dim, y_dim, hidden):
    """Lane-padding-aware per-step working-set estimate."""
    f32 = 4
    io = 2 * tile_n * (_pad128(x_dim) + _pad128(y_dim)) * f32    # double-buffered x/y
    wgt = 2 * (_pad128(x_dim) * 2 * hidden
               + 2 * hidden * 2 * _pad128(y_dim)
               + 4 * _pad128(2 * max(hidden, y_dim))) * f32
    live = tile_n * (2 * _pad128(2 * hidden) + 8 * _pad128(y_dim)) * f32
    out = 2 * 8 * _pad128(y_dim) * f32
    return io + wgt + live + out + (2 << 20)                     # 2 MiB slack


def infonce_mi(x_samples, y_samples, params, *, tile_n=None):
    x_samples = jnp.asarray(x_samples, jnp.float32)
    y_samples = jnp.asarray(y_samples, jnp.float32)
    n, x_dim = x_samples.shape
    _, y_dim = y_samples.shape
    hidden = params[0].shape[1]

    fuse_l2 = hidden <= 128
    w1, b1, w2, b2 = _fuse_params(params, fuse_l2)

    # --- tile selection: big tiles amortize the ~0.35us/step pipeline cost ---
    if tile_n is None:
        tile_n = 8192
    tile_n = int(min(tile_n, n))
    cap = _vmem_cap_bytes()
    while tile_n > 512 and _vmem_estimate_bytes(tile_n, x_dim, y_dim, hidden) > cap:
        tile_n = max(512, tile_n // 2)
    if tile_n < n:
        tile_n = max(8, (tile_n // 8) * 8)    # sublane-aligned tiles when tiling
    grid_n = pl.cdiv(n, tile_n)
    ragged = (n % tile_n) != 0
    vmem_limit = int(min(max(_vmem_estimate_bytes(tile_n, x_dim, y_dim, hidden),
                             8 << 20), cap))

    kernel = functools.partial(
        _infonce_kernel, n_rows=n, y_dim=y_dim, hidden=hidden,
        tile_n=tile_n, ragged=ragged, fuse_l2=fuse_l2)

    w2_map = (lambda i: (0, 0)) if w2.ndim == 2 else (lambda i: (0, 0, 0))

    partials = pl.pallas_call(
        kernel,
        out_shape=jax.ShapeDtypeStruct((grid_n, 6, y_dim), jnp.float32),
        grid=(grid_n,),
        in_specs=[
            pl.BlockSpec((tile_n, x_dim), lambda i: (i, 0)),
            pl.BlockSpec((tile_n, y_dim), lambda i: (i, 0)),
            pl.BlockSpec(w1.shape, lambda i: (0, 0)),    # weights stay resident
            pl.BlockSpec(b1.shape, lambda i: (0, 0)),
            pl.BlockSpec(w2.shape, w2_map),
            pl.BlockSpec(b2.shape, lambda i: (0, 0)),
        ],
        out_specs=pl.BlockSpec((None, 6, y_dim), lambda i: (i, 0, 0)),
        compiler_params=pltpu.CompilerParams(
            # Per-tile partials -> no loop-carried scratch -> row axis is
            # parallel (sharded across both TensorCores on v7x).
            dimension_semantics=("parallel",),
            vmem_limit_bytes=vmem_limit,
        ),
    )(x_samples, y_samples, w1, b1, w2, b2)

    # --- finalize: O(grid * y_dim) in plain JAX --------------------------------
    s = jnp.sum(partials, axis=0)                  # [6, y_dim]
    pos_sum = jnp.sum(s[0])
    c_sum = jnp.sum(s[1])
    cross = jnp.sum(s[2] * s[4])
    byy = jnp.sum(s[3] * s[5])
    n_f = jnp.float32(n)
    # NOTE: expanded-form negative term (C - 2A + B) can cancel for strongly
    # correlated / large-magnitude mu,y; kept in f32 with per-tile partials.
    neg_sum = -0.5 * (n_f * c_sum - 2.0 * cross + byy)
    return pos_sum / n_f - neg_sum / (n_f * n_f)


def init_params(key, x_dim, y_dim, hidden_size):
    """Deterministic init mimicking PyTorch Linear defaults (uniform +/- 1/sqrt(fan_in)).
    Weights returned as [in, out]; biases as [1, out]."""
    def linear(k, fan_in, fan_out):
        kw, kb = jax.random.split(k)
        bound = 1.0 / np.sqrt(fan_in)
        w = jax.random.uniform(kw, (fan_in, fan_out), jnp.float32, -bound, bound)
        b = jax.random.uniform(kb, (1, fan_out), jnp.float32, -bound, bound)
        return w, b

    k1, k2, k3, k4 = jax.random.split(key, 4)
    w1m, b1m = linear(k1, x_dim, hidden_size)
    w2m, b2m = linear(k2, hidden_size, y_dim)
    w1v, b1v = linear(k3, x_dim, hidden_size)
    w2v, b2v = linear(k4, hidden_size, y_dim)
    return (w1m, b1m, w2m, b2m, w1v, b1v, w2v, b2v)


def infonce_mi_ref(x, y, params):
    """Pure-JAX reference matching the PyTorch forward literally (unfused params)."""
    (w1m, b1m, w2m, b2m, w1v, b1v, w2v, b2v) = params
    mu = jnp.maximum(x @ w1m + b1m, 0.0) @ w2m + b2m
    logvar = jnp.tanh(jnp.maximum(x @ w1v + b1v, 0.0) @ w2v + b2v)
    positive = -(mu - y) ** 2 / 2.0 / jnp.exp(logvar)
    negative = -(mu[:, None, :] - y[None, :, :]) ** 2 / 2.0 / jnp.exp(logvar)[:, None, :]
    return positive.sum(axis=1).mean() - negative.sum(axis=2).mean()


if __name__ == "__main__":
    x_dim, y_dim, hidden = 32, 16, 32
    key = jax.random.PRNGKey(0)
    kx, ky, kp = jax.random.split(key, 3)
    params = init_params(kp, x_dim, y_dim, hidden)

    # 1) Small single-tile case (the module's intended shapes).
    n1 = 8
    x1 = jax.random.normal(kx, (n1, x_dim), jnp.float32)
    y1 = jax.random.normal(ky, (n1, y_dim), jnp.float32)
    out1 = jax.block_until_ready(infonce_mi(x1, y1, params))
    ref1 = infonce_mi_ref(x1, y1, params)
    np.testing.assert_allclose(np.asarray(out1), np.asarray(ref1), rtol=1e-4, atol=1e-4)

    # 2) Multi-tile, evenly divisible (parallel grid, masking compiled out).
    n2 = 24
    kx2, ky2 = jax.random.split(jax.random.PRNGKey(1))
    x2 = jax.random.normal(kx2, (n2, x_dim), jnp.float32)
    y2 = jax.random.normal(ky2, (n2, y_dim), jnp.float32)
    out2 = jax.block_until_ready(infonce_mi(x2, y2, params, tile_n=8))
    ref2 = infonce_mi_ref(x2, y2, params)
    np.testing.assert_allclose(np.asarray(out2), np.asarray(ref2), rtol=1e-4, atol=1e-4)

    # 3) Multi-tile with a ragged last tile (exercises the 3-select masking).
    n3 = 20
    kx3, ky3 = jax.random.split(jax.random.PRNGKey(2))
    x3 = jax.random.normal(kx3, (n3, x_dim), jnp.float32)
    y3 = jax.random.normal(ky3, (n3, y_dim), jnp.float32)
    out3 = jax.block_until_ready(infonce_mi(x3, y3, params, tile_n=8))
    ref3 = infonce_mi_ref(x3, y3, params)
    np.testing.assert_allclose(np.asarray(out3), np.asarray(ref3), rtol=1e-4, atol=1e-4)

    # 4) hidden > 128 exercises the split (non-block-diagonal) layer-2 path.
    params_big = init_params(jax.random.PRNGKey(3), x_dim, y_dim, 160)
    out4 = jax.block_until_ready(infonce_mi(x1, y1, params_big))
    ref4 = infonce_mi_ref(x1, y1, params_big)
    np.testing.assert_allclose(np.asarray(out4), np.asarray(ref4), rtol=1e-4, atol=1e-4)

    print("KERNEL_OK")
</pallas_src>

<mosaic_0001>
module attributes {stable_mosaic.version = 11 : i64} {
  func.func @_infonce_kernel(%arg0: i32, %arg1: memref<8x32xf32, #tpu.memory_space<vmem>>, %arg2: memref<8x16xf32, #tpu.memory_space<vmem>>, %arg3: memref<32x64xf32, #tpu.memory_space<vmem>>, %arg4: memref<1x64xf32, #tpu.memory_space<vmem>>, %arg5: memref<64x32xf32, #tpu.memory_space<vmem>>, %arg6: memref<1x32xf32, #tpu.memory_space<vmem>>, %arg7: memref<1x6x16xf32, #tpu.memory_space<vmem>>) attributes {dimension_semantics = [#tpu.dimension_semantics<parallel>], iteration_bounds = array<i64: 1>, scalar_prefetch = 0 : i64, scratch_operands = 0 : i64, tpu.core_type = #tpu.core_type<tc>, window_params = [{transform_indices = @transform_0, window_bounds = array<i64: 8, 32>}, {transform_indices = @transform_1, window_bounds = array<i64: 8, 16>}, {pipeline_mode = #tpu.pipeline_mode<synchronous>, transform_indices = @transform_2, window_bounds = array<i64: 32, 64>}, {pipeline_mode = #tpu.pipeline_mode<synchronous>, transform_indices = @transform_3, window_bounds = array<i64: 1, 64>}, {pipeline_mode = #tpu.pipeline_mode<synchronous>, transform_indices = @transform_4, window_bounds = array<i64: 64, 32>}, {pipeline_mode = #tpu.pipeline_mode<synchronous>, transform_indices = @transform_5, window_bounds = array<i64: 1, 32>}, {transform_indices = @transform_6, window_bounds = array<i64: 1, 6, 16>}]} {
    %c0 = arith.constant 0 : index
    %c0_0 = arith.constant 0 : index
    %0 = vector.load %arg1[%c0, %c0_0] : memref<8x32xf32, #tpu.memory_space<vmem>>, vector<8x32xf32>
    %c0_1 = arith.constant 0 : index
    %c0_2 = arith.constant 0 : index
    %1 = vector.load %arg2[%c0_1, %c0_2] : memref<8x16xf32, #tpu.memory_space<vmem>>, vector<8x16xf32>
    %c0_3 = arith.constant 0 : index
    %c0_4 = arith.constant 0 : index
    %2 = vector.load %arg3[%c0_3, %c0_4] : memref<32x64xf32, #tpu.memory_space<vmem>>, vector<32x64xf32>
    %cst = arith.constant dense<0.000000e+00> : vector<8x64xf32>
    %3 = tpu.matmul %0, %2, %cst {dimension_numbers = #tpu.dot_dimension_numbers<[1], [0], [0], [1], [0, 0, 1, 1], [], []>} : vector<8x32xf32>, vector<32x64xf32>, vector<8x64xf32> -> vector<8x64xf32>
    %c0_5 = arith.constant 0 : index
    %c0_6 = arith.constant 0 : index
    %4 = vector.load %arg4[%c0_5, %c0_6] : memref<1x64xf32, #tpu.memory_space<vmem>>, vector<1x64xf32>
    %5 = vector.broadcast %4 : vector<1x64xf32> to vector<8x64xf32>
    %6 = arith.addf %3, %5 : vector<8x64xf32>
    %cst_7 = arith.constant 0.000000e+00 : f32
    %7 = vector.broadcast %cst_7 : f32 to vector<8x64xf32>
    %8 = arith.maximumf %6, %7 : vector<8x64xf32>
    %c0_8 = arith.constant 0 : index
    %c0_9 = arith.constant 0 : index
    %9 = vector.load %arg5[%c0_8, %c0_9] : memref<64x32xf32, #tpu.memory_space<vmem>>, vector<64x32xf32>
    %cst_10 = arith.constant dense<0.000000e+00> : vector<8x32xf32>
    %10 = tpu.matmul %8, %9, %cst_10 {dimension_numbers = #tpu.dot_dimension_numbers<[1], [0], [0], [1], [0, 0, 1, 1], [], []>} : vector<8x64xf32>, vector<64x32xf32>, vector<8x32xf32> -> vector<8x32xf32>
    %c0_11 = arith.constant 0 : index
    %c0_12 = arith.constant 0 : index
    %11 = vector.load %arg6[%c0_11, %c0_12] : memref<1x32xf32, #tpu.memory_space<vmem>>, vector<1x32xf32>
    %12 = vector.broadcast %11 : vector<1x32xf32> to vector<8x32xf32>
    %13 = arith.addf %10, %12 : vector<8x32xf32>
    %14 = vector.extract_strided_slice %13 {offsets = [0, 0], sizes = [8, 16], strides = [1, 1]} : vector<8x32xf32> to vector<8x16xf32>
    %15 = vector.extract_strided_slice %13 {offsets = [0, 16], sizes = [8, 16], strides = [1, 1]} : vector<8x32xf32> to vector<8x16xf32>
    %16 = math.tanh %15 : vector<8x16xf32>
    %cst_13 = arith.constant 0.000000e+00 : f32
    %17 = vector.broadcast %cst_13 : f32 to vector<8x16xf32>
    %18 = arith.subf %17, %16 : vector<8x16xf32>
    %19 = math.exp %18 : vector<8x16xf32>
    %20 = arith.mulf %14, %19 : vector<8x16xf32>
    %21 = arith.subf %14, %1 : vector<8x16xf32>
    %cst_14 = arith.constant -5.000000e-01 : f32
    %22 = vector.broadcast %cst_14 : f32 to vector<8x16xf32>
    %23 = arith.mulf %22, %21 : vector<8x16xf32>
    %24 = arith.mulf %23, %21 : vector<8x16xf32>
    %25 = arith.mulf %24, %19 : vector<8x16xf32>
    %26 = arith.mulf %14, %20 : vector<8x16xf32>
    %cst_15 = arith.constant dense<0.000000e+00> : vector<16xf32>
    %27 = vector.multi_reduction <add>, %25, %cst_15 [0] : vector<8x16xf32> to vector<16xf32>
    %28 = vector.shape_cast %27 : vector<16xf32> to vector<1x16xf32>
    %c0_16 = arith.constant 0 : index
    %c0_17 = arith.constant 0 : index
    %c0_18 = arith.constant 0 : index
    %29 = vector.load %arg7[%c0_16, %c0_17, %c0_18] : memref<1x6x16xf32, #tpu.memory_space<vmem>>, vector<1x1x16xf32>
    %30 = vector.shape_cast %29 : vector<1x1x16xf32> to vector<1x16xf32>
    %31 = vector.shape_cast %28 : vector<1x16xf32> to vector<1x1x16xf32>
    tpu.vector_store %arg7[%c0_16, %c0_17, %c0_18], %31 {strides = array<i32>} : memref<1x6x16xf32, #tpu.memory_space<vmem>>, vector<1x1x16xf32>,
    %cst_19 = arith.constant dense<0.000000e+00> : vector<16xf32>
    %32 = vector.multi_reduction <add>, %26, %cst_19 [0] : vector<8x16xf32> to vector<16xf32>
    %33 = vector.shape_cast %32 : vector<16xf32> to vector<1x16xf32>
    %c0_20 = arith.constant 0 : index
    %c1 = arith.constant 1 : index
    %c0_21 = arith.constant 0 : index
    %34 = vector.load %arg7[%c0_20, %c1, %c0_21] : memref<1x6x16xf32, #tpu.memory_space<vmem>>, vector<1x1x16xf32>
    %35 = vector.shape_cast %34 : vector<1x1x16xf32> to vector<1x16xf32>
    %36 = vector.shape_cast %33 : vector<1x16xf32> to vector<1x1x16xf32>
    tpu.vector_store %arg7[%c0_20, %c1, %c0_21], %36 {strides = array<i32>} : memref<1x6x16xf32, #tpu.memory_space<vmem>>, vector<1x1x16xf32>,
    %cst_22 = arith.constant dense<0.000000e+00> : vector<16xf32>
    %37 = vector.multi_reduction <add>, %20, %cst_22 [0] : vector<8x16xf32> to vector<16xf32>
    %38 = vector.shape_cast %37 : vector<16xf32> to vector<1x16xf32>
    %c0_23 = arith.constant 0 : index
    %c2 = arith.constant 2 : index
    %c0_24 = arith.constant 0 : index
    %39 = vector.load %arg7[%c0_23, %c2, %c0_24] : memref<1x6x16xf32, #tpu.memory_space<vmem>>, vector<1x1x16xf32>
    %40 = vector.shape_cast %39 : vector<1x1x16xf32> to vector<1x16xf32>
    %41 = vector.shape_cast %38 : vector<1x16xf32> to vector<1x1x16xf32>
    tpu.vector_store %arg7[%c0_23, %c2, %c0_24], %41 {strides = array<i32>} : memref<1x6x16xf32, #tpu.memory_space<vmem>>, vector<1x1x16xf32>,
    %cst_25 = arith.constant dense<0.000000e+00> : vector<16xf32>
    %42 = vector.multi_reduction <add>, %19, %cst_25 [0] : vector<8x16xf32> to vector<16xf32>
    %43 = vector.shape_cast %42 : vector<16xf32> to vector<1x16xf32>
    %c0_26 = arith.constant 0 : index
    %c3 = arith.constant 3 : index
    %c0_27 = arith.constant 0 : index
    %44 = vector.load %arg7[%c0_26, %c3, %c0_27] : memref<1x6x16xf32, #tpu.memory_space<vmem>>, vector<1x1x16xf32>
    %45 = vector.shape_cast %44 : vector<1x1x16xf32> to vector<1x16xf32>
    %46 = vector.shape_cast %43 : vector<1x16xf32> to vector<1x1x16xf32>
    tpu.vector_store %arg7[%c0_26, %c3, %c0_27], %46 {strides = array<i32>} : memref<1x6x16xf32, #tpu.memory_space<vmem>>, vector<1x1x16xf32>,
    %cst_28 = arith.constant dense<0.000000e+00> : vector<16xf32>
    %47 = vector.multi_reduction <add>, %1, %cst_28 [0] : vector<8x16xf32> to vector<16xf32>
    %48 = vector.shape_cast %47 : vector<16xf32> to vector<1x16xf32>
    %c0_29 = arith.constant 0 : index
    %c4 = arith.constant 4 : index
    %c0_30 = arith.constant 0 : index
    %49 = vector.load %arg7[%c0_29, %c4, %c0_30] : memref<1x6x16xf32, #tpu.memory_space<vmem>>, vector<1x1x16xf32>
    %50 = vector.shape_cast %49 : vector<1x1x16xf32> to vector<1x16xf32>
    %51 = vector.shape_cast %48 : vector<1x16xf32> to vector<1x1x16xf32>
    tpu.vector_store %arg7[%c0_29, %c4, %c0_30], %51 {strides = array<i32>} : memref<1x6x16xf32, #tpu.memory_space<vmem>>, vector<1x1x16xf32>,
    %52 = arith.mulf %1, %1 : vector<8x16xf32>
    %cst_31 = arith.constant dense<0.000000e+00> : vector<16xf32>
    %53 = vector.multi_reduction <add>, %52, %cst_31 [0] : vector<8x16xf32> to vector<16xf32>
    %54 = vector.shape_cast %53 : vector<16xf32> to vector<1x16xf32>
    %c0_32 = arith.constant 0 : index
    %c5 = arith.constant 5 : index
    %c0_33 = arith.constant 0 : index
    %55 = vector.load %arg7[%c0_32, %c5, %c0_33] : memref<1x6x16xf32, #tpu.memory_space<vmem>>, vector<1x1x16xf32>
    %56 = vector.shape_cast %55 : vector<1x1x16xf32> to vector<1x16xf32>
    %57 = vector.shape_cast %54 : vector<1x16xf32> to vector<1x1x16xf32>
    tpu.vector_store %arg7[%c0_32, %c5, %c0_33], %57 {strides = array<i32>} : memref<1x6x16xf32, #tpu.memory_space<vmem>>, vector<1x1x16xf32>,
    return
  }
  func.func @transform_0(%arg0: i32) -> (i32, i32) {
    %c0_i32 = arith.constant 0 : i32
    %c0_i32_0 = arith.constant 0 : i32
    return %arg0, %c0_i32 : i32, i32
  }
  func.func @transform_1(%arg0: i32) -> (i32, i32) {
    %c0_i32 = arith.constant 0 : i32
    %c0_i32_0 = arith.constant 0 : i32
    return %arg0, %c0_i32 : i32, i32
  }
  func.func @transform_2(%arg0: i32) -> (i32, i32) {
    %c0_i32 = arith.constant 0 : i32
    %c0_i32_0 = arith.constant 0 : i32
    %c0_i32_1 = arith.constant 0 : i32
    return %c0_i32, %c0_i32_0 : i32, i32
  }
  func.func @transform_3(%arg0: i32) -> (i32, i32) {
    %c0_i32 = arith.constant 0 : i32
    %c0_i32_0 = arith.constant 0 : i32
    %c0_i32_1 = arith.constant 0 : i32
    return %c0_i32, %c0_i32_0 : i32, i32
  }
  func.func @transform_4(%arg0: i32) -> (i32, i32) {
    %c0_i32 = arith.constant 0 : i32
    %c0_i32_0 = arith.constant 0 : i32
    %c0_i32_1 = arith.constant 0 : i32
    return %c0_i32, %c0_i32_0 : i32, i32
  }
  func.func @transform_5(%arg0: i32) -> (i32, i32) {
    %c0_i32 = arith.constant 0 : i32
    %c0_i32_0 = arith.constant 0 : i32
    %c0_i32_1 = arith.constant 0 : i32
    return %c0_i32, %c0_i32_0 : i32, i32
  }
  func.func @transform_6(%arg0: i32) -> (i32, i32, i32) {
    %c0_i32 = arith.constant 0 : i32
    %c0_i32_0 = arith.constant 0 : i32
    %c0_i32_1 = arith.constant 0 : i32
    return %arg0, %c0_i32, %c0_i32_0 : i32, i32, i32
  }
}

</mosaic_0001>

<llo_original>
// kernel: tpu_custom_call.1
$region0: #{tpu_custom_call.1}
  #allocation0 [shape = 'u32[]', space=smem, size = 0x4, offset = 0x4, fixed_abs, tag = 'smem constant byte address 0x4 - core index']
  #allocation1 [shape = 'u32[144,128]{1,0:T(1,128)}', space=vmem, size = 0x12000, scoped, tag = 'internal scratch']
  %s0 = inlined_call_operand.vmem [shape: f32[8,32], index: 0, kind: input, shape index: {}]
  %s1 = inlined_call_operand.vmem [shape: f32[8,16], index: 1, kind: input, shape index: {}]
  %s2 = inlined_call_operand.vmem [shape: f32[32,64], index: 2, kind: input, shape index: {}]
  %s3 = inlined_call_operand.vmem [shape: f32[1,64], index: 3, kind: input, shape index: {}]
  %s4 = inlined_call_operand.vmem [shape: f32[64,32], index: 4, kind: input, shape index: {}]
  %s5 = inlined_call_operand.vmem [shape: f32[1,32], index: 5, kind: input, shape index: {}]
  %s6 = inlined_call_operand.vmem [shape: f32[1,6,16], index: 6, kind: output, shape index: {}]
  %s7 = sld [smem:[#allocation0]]
  $region34: #{tpu_custom_call.1} parent=0
    _
  %s9 = ssub.s32 1, %s7
  %s10 = scalar_select 0, %s9, %s7
  // Predicated region
  $region2: #{tpu_custom_call.1} parent=0 // pred_check
    _
  $region3: #{tpu_custom_call.1} parent=0 // pred_check_branch
    %12 = sbr.rel (0) target = $region5
  $region4: #{tpu_custom_call.1} parent=0 // pred_region
    _
  $region5: #{tpu_custom_call.1} parent=0 // pred_fallthru
    _
  // Predicated region
  $region6: #{tpu_custom_call.1} parent=0 // pred_check
    _
  $region7: #{tpu_custom_call.1} parent=0 // pred_check_branch
    %14 = sbr.rel (0) target = $region9
  $region8: #{tpu_custom_call.1} parent=0 // pred_region
    _
  $region9: #{tpu_custom_call.1} parent=0 // pred_fallthru
    _
  // Predicated region
  $region10: #{tpu_custom_call.1} parent=0 // pred_check
    _
  $region11: #{tpu_custom_call.1} parent=0 // pred_check_branch
    %16 = sbr.rel (0) target = $region13
  $region12: #{tpu_custom_call.1} parent=0 // pred_region
    _
  $region13: #{tpu_custom_call.1} parent=0 // pred_fallthru
    _
  // Predicated region
  $region14: #{tpu_custom_call.1} parent=0 // pred_check
    _
  $region15: #{tpu_custom_call.1} parent=0 // pred_check_branch
    %18 = sbr.rel (0) target = $region17
  $region16: #{tpu_custom_call.1} parent=0 // pred_region
    _
  $region17: #{tpu_custom_call.1} parent=0 // pred_fallthru
    _
  // Predicated region
  $region18: #{tpu_custom_call.1} parent=0 // pred_check
    _
  $region19: #{tpu_custom_call.1} parent=0 // pred_check_branch
    %20 = sbr.rel (0) target = $region21
  $region20: #{tpu_custom_call.1} parent=0 // pred_region
    _
  $region21: #{tpu_custom_call.1} parent=0 // pred_fallthru
    _
  // Predicated region
  $region22: #{tpu_custom_call.1} parent=0 // pred_check
    _
  $region23: #{tpu_custom_call.1} parent=0 // pred_check_branch
    %22 = sbr.rel (0) target = $region25
  $region24: #{tpu_custom_call.1} parent=0 // pred_region
    _
  $region25: #{tpu_custom_call.1} parent=0 // pred_fallthru
    _
  %v23 = vld [vmem:[%s0] sm:$0xff]
  %v24 = vld [vmem:[%s1] sm:$0xff]
  %v25 = vld [vmem:[%s2] sm:$0xff]
  %v26 = vld [vmem:[%s2 + $0x8] sm:$0xff]
  %v27 = vld [vmem:[%s2 + $0x10] sm:$0xff]
  %v28 = vld [vmem:[%s2 + $0x18] sm:$0xff]
  %v29 = vld [vmem:[%s3] sm:$0x1]
  %v31 = vlaneseq
  %v32 = vshrl.u32 %v31, 7
  %v33 = vsub.s32 0, %v32
  %v34 = vrot.slane %v29, %v33
  %vm36 = vcmask 261120
  %v38 = vsel %vm36, %v23, 0
  %40 = vmatprep.subr.mxu0 0.0
  %41 = vmatpush1.msra.mxu0 0.0
  %42 = vmatprep.subr.mxu0 0.0
  %43 = vmatpush1.msra.mxu0 0.0
  %44 = vmatprep.subr.mxu0 0.0
  %45 = vmatpush1.msra.mxu0 0.0
  %46 = vmatprep.subr.mxu0 0.0
  %47 = vmatpush1.msra.mxu0 0.0
  %48 = vmatprep.subr.mxu0 0.0
  %49 = vmatpush1.msra.mxu0 0.0
  %50 = vmatprep.subr.mxu0 0.0
  %51 = vmatpush1.msra.mxu0 0.0
  %52 = vmatprep.subr.mxu0 0.0
  %53 = vmatpush1.msra.mxu0 0.0
  %54 = vmatprep.subr.mxu0 0.0
  %55 = vmatpush1.msra.mxu0 0.0
  %56 = vmatprep.subr.mxu0 0.0
  %57 = vmatpush1.msra.mxu0 0.0
  %58 = vmatprep.subr.mxu0 0.0
  %59 = vmatpush1.msra.mxu0 0.0
  %60 = vmatprep.subr.mxu0 0.0
  %61 = vmatpush1.msra.mxu0 0.0
  %62 = vmatprep.subr.mxu0 0.0
  %63 = vmatpush1.msra.mxu0 0.0
  %64 = vmatprep.subr.mxu0 0.0
  %65 = vmatpush1.msra.mxu0 %v28
  %66 = vmatprep.subr.mxu0 0.0
  %67 = vmatpush1.msra.mxu0 %v27
  %68 = vmatprep.subr.mxu0 0.0
  %69 = vmatpush1.msra.mxu0 %v26
  %70 = vmatprep.subr.mxu0 0.0
  %71 = vmatpush1.msra.mxu0 %v25
  %72 = vmatprep.subr.mxu0 0.0
  %73 = vmatpush2.msra.mxu0 0.0
  %74 = vmatprep.subr.mxu0 0.0
  %75 = vmatpush2.msra.mxu0 0.0
  %76 = vmatprep.subr.mxu0 0.0
  %77 = vmatpush2.msra.mxu0 0.0
  %78 = vmatprep.subr.mxu0 0.0
  %79 = vmatpush2.msra.mxu0 0.0
  %80 = vmatprep.subr.mxu0 0.0
  %81 = vmatpush2.msra.mxu0 0.0
  %82 = vmatprep.subr.mxu0 0.0
  %83 = vmatpush2.msra.mxu0 0.0
  %84 = vmatprep.subr.mxu0 0.0
  %85 = vmatpush2.msra.mxu0 0.0
  %86 = vmatprep.subr.mxu0 0.0
  %87 = vmatpush2.msra.mxu0 0.0
  %88 = vmatprep.subr.mxu0 0.0
  %89 = vmatpush2.msra.mxu0 0.0
  %90 = vmatprep.subr.mxu0 0.0
  %91 = vmatpush2.msra.mxu0 0.0
  %92 = vmatprep.subr.mxu0 0.0
  %93 = vmatpush2.msra.mxu0 0.0
  %94 = vmatprep.subr.mxu0 0.0
  %95 = vmatpush2.msra.mxu0 0.0
  %96 = vmatprep.subr.mxu0 0.0
  %97 = vmatpush2.msra.mxu0 0.0
  %98 = vmatprep.subr.mxu0 0.0
  %99 = vmatpush2.msra.mxu0 0.0
  %100 = vmatprep.subr.mxu0 0.0
  %101 = vmatpush2.msra.mxu0 0.0
  %102 = vmatprep.subr.mxu0 0.0
  %103 = vmatpush2.msra.mxu0 0.0
  %104 = vmatprep.mubr.f32.mxu0 0.0
  %105 = vmatmul.mubr.f32.gmra.mxu0 %v38
  %v106 = vpop.f32.mrf.mxu0
  %v107 = vadd.f32 %v34, %v106
  %v108 = vpop.f32.mrf.mxu0
  %109 = vdwg.mxu0
  %v110 = vmax.f32 %v107, 0.0
  %v111 = vld [vmem:[%s4] sm:$0xff]
  %v112 = vld [vmem:[%s4 + $0x8] sm:$0xff]
  %v113 = vld [vmem:[%s4 + $0x10] sm:$0xff]
  %v114 = vld [vmem:[%s4 + $0x18] sm:$0xff]
  %v115 = vld [vmem:[%s4 + $0x20] sm:$0xff]
  %v116 = vld [vmem:[%s4 + $0x28] sm:$0xff]
  %v117 = vld [vmem:[%s4 + $0x30] sm:$0xff]
  %v118 = vld [vmem:[%s4 + $0x38] sm:$0xff]
  %v119 = vld [vmem:[%s5] sm:$0x1]
  %v121 = vlaneseq
  %v122 = vshrl.u32 %v121, 7
  %v123 = vsub.s32 0, %v122
  %v124 = vrot.slane %v119, %v123
  %vm126 = vcmask 523264
  %v128 = vsel %vm126, %v110, 0
  %130 = vmatprep.subr.mxu0 0.0
  %131 = vmatpush1.msra.mxu0 0.0
  %132 = vmatprep.subr.mxu0 0.0
  %133 = vmatpush1.msra.mxu0 0.0
  %134 = vmatprep.subr.mxu0 0.0
  %135 = vmatpush1.msra.mxu0 0.0
  %136 = vmatprep.subr.mxu0 0.0
  %137 = vmatpush1.msra.mxu0 0.0
  %138 = vmatprep.subr.mxu0 0.0
  %139 = vmatpush1.msra.mxu0 0.0
  %140 = vmatprep.subr.mxu0 0.0
  %141 = vmatpush1.msra.mxu0 0.0
  %142 = vmatprep.subr.mxu0 0.0
  %143 = vmatpush1.msra.mxu0 0.0
  %144 = vmatprep.subr.mxu0 0.0
  %145 = vmatpush1.msra.mxu0 0.0
  %146 = vmatprep.subr.mxu0 0.0
  %147 = vmatpush1.msra.mxu0 %v118
  %148 = vmatprep.subr.mxu0 0.0
  %149 = vmatpush1.msra.mxu0 %v117
  %150 = vmatprep.subr.mxu0 0.0
  %151 = vmatpush1.msra.mxu0 %v116
  %152 = vmatprep.subr.mxu0 0.0
  %153 = vmatpush1.msra.mxu0 %v115
  %154 = vmatprep.subr.mxu0 0.0
  %155 = vmatpush1.msra.mxu0 %v114
  %156 = vmatprep.subr.mxu0 0.0
  %157 = vmatpush1.msra.mxu0 %v113
  %158 = vmatprep.subr.mxu0 0.0
  %159 = vmatpush1.msra.mxu0 %v112
  %160 = vmatprep.subr.mxu0 0.0
  %161 = vmatpush1.msra.mxu0 %v111
  %162 = vmatprep.subr.mxu0 0.0
  %163 = vmatpush2.msra.mxu0 0.0
  %164 = vmatprep.subr.mxu0 0.0
  %165 = vmatpush2.msra.mxu0 0.0
  %166 = vmatprep.subr.mxu0 0.0
  %167 = vmatpush2.msra.mxu0 0.0
  %168 = vmatprep.subr.mxu0 0.0
  %169 = vmatpush2.msra.mxu0 0.0
  %170 = vmatprep.subr.mxu0 0.0
  %171 = vmatpush2.msra.mxu0 0.0
  %172 = vmatprep.subr.mxu0 0.0
  %173 = vmatpush2.msra.mxu0 0.0
  %174 = vmatprep.subr.mxu0 0.0
  %175 = vmatpush2.msra.mxu0 0.0
  %176 = vmatprep.subr.mxu0 0.0
  %177 = vmatpush2.msra.mxu0 0.0
  %178 = vmatprep.subr.mxu0 0.0
  %179 = vmatpush2.msra.mxu0 0.0
  %180 = vmatprep.subr.mxu0 0.0
  %181 = vmatpush2.msra.mxu0 0.0
  %182 = vmatprep.subr.mxu0 0.0
  %183 = vmatpush2.msra.mxu0 0.0
  %184 = vmatprep.subr.mxu0 0.0
  %185 = vmatpush2.msra.mxu0 0.0
  %186 = vmatprep.subr.mxu0 0.0
  %187 = vmatpush2.msra.mxu0 0.0
  %188 = vmatprep.subr.mxu0 0.0
  %189 = vmatpush2.msra.mxu0 0.0
  %190 = vmatprep.subr.mxu0 0.0
  %191 = vmatpush2.msra.mxu0 0.0
  %192 = vmatprep.subr.mxu0 0.0
  %193 = vmatpush2.msra.mxu0 0.0
  %194 = vmatprep.mubr.f32.mxu0 0.0
  %195 = vmatmul.mubr.f32.gmra.mxu0 %v128
  %v196 = vpop.f32.mrf.mxu0
  %v197 = vadd.f32 %v124, %v196
  %v198 = vpop.f32.mrf.mxu0
  %199 = vdwg.mxu0
  %v200 = vtanh.pop %v197
  %v201 = vsub.f32 0.0, %v200
  %v202 = vmul.f32 %v201, 1.442695
  %v203 = vpow.pop %v202
  %205 = vrot.lane.b32.xlu0 %v203, 112
  %v206 = vpop.permute.xlu0 %205
  %v208 = vmul.f32 %v197, %v206
  %v209 = vsub.f32 %v197, %v24
  %v210 = vmul.f32 %v209, -0.5
  %v211 = vmul.f32 %v210, %v209
  %v212 = vmul.f32 %v211, %v206
  %v213 = vmul.f32 %v197, %v208
  %vm214 = vcmask 130048
  %v215 = vsel %vm214, %v212, 0.0
  %v216 = vrot.slane %v215, 4
  %v217 = vadd.f32 %v215, %v216
  %v218 = vrot.slane %v217, 2
  %v219 = vadd.f32 %v217, %v218
  %v220 = vrot.slane %v219, 1
  %v221 = vadd.f32 %v219, %v220
  %vm222 = vcmask 122880
  %223 = vst.msk [vmem:[%s6] sm:$0x1] %vm222, %v221
  %v224 = vsel %vm214, %v213, 0.0
  %v225 = vrot.slane %v224, 4
  %v226 = vadd.f32 %v224, %v225
  %v227 = vrot.slane %v226, 2
  %v228 = vadd.f32 %v226, %v227
  %v229 = vrot.slane %v228, 1
  %v230 = vadd.f32 %v228, %v229
  %231 = vst.msk [vmem:[%s6 + $0x1] sm:$0x1] %vm222, %v230
  %v232 = vsel %vm214, %v208, 0.0
  %v233 = vrot.slane %v232, 4
  %v234 = vadd.f32 %v232, %v233
  %v235 = vrot.slane %v234, 2
  %v236 = vadd.f32 %v234, %v235
  %v237 = vrot.slane %v236, 1
  %v238 = vadd.f32 %v236, %v237
  %239 = vst.msk [vmem:[%s6 + $0x2] sm:$0x1] %vm222, %v238
  %vm240 = vcmask 261248
  %v241 = vsel %vm240, %v203, 0.0
  %v242 = vrot.slane %v241, 4
  %v243 = vadd.f32 %v241, %v242
  %v244 = vrot.slane %v243, 2
  %v245 = vadd.f32 %v243, %v244
  %v246 = vrot.slane %v245, 1
  %v247 = vadd.f32 %v245, %v246
  %249 = vrot.lane.b32.xlu0 %v247, 112
  %v250 = vpop.permute.xlu0 %249
  %252 = vst.msk [vmem:[%s6 + $0x3] sm:$0x1] %vm222, %v250
  %v253 = vsel %vm214, %v24, 0.0
  %v254 = vrot.slane %v253, 4
  %v255 = vadd.f32 %v253, %v254
  %v256 = vrot.slane %v255, 2
  %v257 = vadd.f32 %v255, %v256
  %v258 = vrot.slane %v257, 1
  %v259 = vadd.f32 %v257, %v258
  %260 = vst.msk [vmem:[%s6 + $0x4] sm:$0x1] %vm222, %v259
  %v261 = vmul.f32 %v24, %v24
  %v262 = vsel %vm214, %v261, 0.0
  %v263 = vrot.slane %v262, 4
  %v264 = vadd.f32 %v262, %v263
  %v265 = vrot.slane %v264, 2
  %v266 = vadd.f32 %v264, %v265
  %v267 = vrot.slane %v266, 1
  %v268 = vadd.f32 %v266, %v267
  %269 = vst.msk [vmem:[%s6 + $0x5] sm:$0x1] %vm222, %v268
  // Predicated region
  $region26: #{tpu_custom_call.1} parent=0 // pred_check
    _
  $region27: #{tpu_custom_call.1} parent=0 // pred_check_branch
    %271 = sbr.rel (0) target = $region29
  $region28: #{tpu_custom_call.1} parent=0 // pred_region
    _
  $region29: #{tpu_custom_call.1} parent=0 // pred_fallthru
    _
  // Predicated region
  $region30: #{tpu_custom_call.1} parent=0 // pred_check
    _
  $region31: #{tpu_custom_call.1} parent=0 // pred_check_branch
    %273 = sbr.rel (0) target = $region33
  $region32: #{tpu_custom_call.1} parent=0 // pred_region
    _
  $region33: #{tpu_custom_call.1} parent=0 // pred_fallthru
    _

</llo_original>
